<compile_context>
chip_gen: v5e
topology: v5e:2x2
jax: 0.10.0
libtpu: 0.0.40
codegen_flags: <defaults>
</compile_context>

<pallas_src>
import math

import jax
import jax.numpy as jnp
import numpy as np
from jax import lax
from jax.experimental import pallas as pl
from jax.experimental.pallas import tpu as pltpu


# ----------------------------------------------------------------------------
# Host-side "parameters": 1D Gaussian and the banded convolution matrices.
# ----------------------------------------------------------------------------
def _gaussian_1d(window_size: int, sigma: float = 1.5) -> np.ndarray:
    g = np.array(
        [math.exp(-((x - window_size // 2) ** 2) / float(2 * sigma ** 2))
         for x in range(window_size)],
        dtype=np.float32,
    )
    return g / g.sum()


def _band_matrices(g: np.ndarray, H: int, W: int):
    K = g.shape[0]
    Ho, Wo = H - K + 1, W - K + 1
    bh = np.zeros((W, Wo), np.float32)     # row (lane-axis) pass:     X @ BH
    bv = np.zeros((Ho, H), np.float32)     # col (sublane-axis) pass: BV @ T
    for j in range(Wo):
        bh[j:j + K, j] = g
    for i in range(Ho):
        bv[i, i:i + K] = g
    return bv, bh


def _choose_gb(G: int, H: int, W: int, itemsize: int) -> int:
    """Largest divisor of G with GB*H <= 256 MXU rows and the per-step input
    block inside a conservative VMEM byte budget; prefer GS >= 2 so the
    'parallel' grid axis can be sharded across v7x's two TensorCores."""
    row_target = 256                       # v6e/v7x MXU row granule (ok on v5e)
    blk_budget = 4 * 1024 * 1024           # per-input per-step block bytes
    divs = [d for d in range(1, G + 1)
            if G % d == 0 and d * H <= row_target
            and d * H * W * itemsize <= blk_budget]
    if not divs:
        return 1
    pref = [d for d in divs if G // d >= 2]
    return max(pref) if pref else max(divs)


# ----------------------------------------------------------------------------
# Pallas kernel: one stack of GB planes per grid step.
#   img refs : (GB*H, W)     band refs : bh (W, Wo), bvd (GB*Ho, GB*H)
#   c_ref    : SMEM f32[2] = [C1, C2]
#   out_ref  : (8, 128) aligned partial-sum block (value replicated).
# ----------------------------------------------------------------------------
def _ssim_kernel(img1_ref, img2_ref, bh_ref, bvd_ref, c_ref, out_ref):
    x1 = img1_ref[...].astype(jnp.float32)
    x2 = img2_ref[...].astype(jnp.float32)
    bh = bh_ref[...]
    bvd = bvd_ref[...]
    gbh = x1.shape[0]

    # One fused horizontal (lane-axis) Gaussian pass for all five statistics.
    stacked = jnp.concatenate([x1, x2, x1 * x1, x2 * x2, x1 * x2], axis=0)
    t = jnp.dot(stacked, bh, preferred_element_type=jnp.float32)   # (5*GBH, Wo)

    def vpass(s):
        # Sublane-aligned static slice (offset = s*GBH) + vertical MXU pass.
        return jnp.dot(bvd, t[s * gbh:(s + 1) * gbh, :],
                       preferred_element_type=jnp.float32)         # (GB*Ho, Wo)

    mu1, mu2 = vpass(0), vpass(1)
    s11, s22, s12 = vpass(2), vpass(3), vpass(4)

    mu1_sq = mu1 * mu1
    mu2_sq = mu2 * mu2
    mu1_mu2 = mu1 * mu2
    sigma1_sq = s11 - mu1_sq
    sigma2_sq = s22 - mu2_sq
    sigma12 = s12 - mu1_mu2

    C1 = c_ref[0]
    C2 = c_ref[1]

    v1 = 2.0 * sigma12 + C2
    v2 = sigma1_sq + sigma2_sq + C2
    ssim_map = (2.0 * mu1_mu2 + C1) * v1 / ((mu1_sq + mu2_sq + C1) * v2)

    # Full (8,128)-aligned unmasked store of this step's partial sum.
    out_ref[...] = jnp.broadcast_to(jnp.sum(ssim_map), out_ref.shape).astype(
        out_ref.dtype)


# ----------------------------------------------------------------------------
# Wrapper: data-range constants, plane batching, pallas_call plumbing.
# ----------------------------------------------------------------------------
def ssim_pallas(img1: jax.Array, img2: jax.Array, window_size: int = 11,
                val_range=None) -> jax.Array:
    N, C, H, W = img1.shape
    K = min(window_size, H, W)             # real_size in the reference
    Ho, Wo = H - K + 1, W - K + 1
    G = N * C

    itemsize = jnp.dtype(img1.dtype).itemsize
    GB = _choose_gb(G, H, W, itemsize)
    GS = G // GB

    g1d = _gaussian_1d(K)
    bv, bh = _band_matrices(g1d, H, W)
    # Block-diagonal vertical-pass matrix so GB stacked planes never mix.
    bvd = np.zeros((GB * Ho, GB * H), np.float32)
    for p in range(GB):
        bvd[p * Ho:(p + 1) * Ho, p * H:(p + 1) * H] = bv

    if val_range is None:
        # Reference behaviour: data-dependent dynamic range (extra HBM pass).
        max_val = jnp.where(jnp.max(img1) > 128, 255.0, 1.0)
        min_val = jnp.where(jnp.min(img1) < -0.5, -1.0, 0.0)
        L = max_val - min_val
    else:
        L = jnp.float32(val_range)          # known range: skip the HBM pass
    c_vals = jnp.stack([(0.01 * L) ** 2, (0.03 * L) ** 2]).astype(jnp.float32)

    # No dtype upcast here: DMA the source dtype, cast inside the kernel.
    x1 = img1.reshape(GS, GB * H, W)
    x2 = img2.reshape(GS, GB * H, W)

    # Rough per-step VMEM working-set estimate: double-buffered inputs, band
    # matrices and f32 temporaries.  Raise the scoped limit only when needed
    # (v5e default is 16 MiB); cap at v7x's 64 MiB physical VMEM.
    est = (2 * 2 * GB * H * W * itemsize
           + bh.nbytes + bvd.nbytes
           + 7 * GB * H * W * 4
           + 6 * GB * H * Wo * 4
           + 14 * GB * Ho * Wo * 4
           + 2 * 8 * 128 * 4)
    cp_kwargs = dict(dimension_semantics=("parallel",))
    if est > 16 * 1024 * 1024:
        cp_kwargs["vmem_limit_bytes"] = int(min(2 * est, 64 * 1024 * 1024))

    grid_spec = pltpu.PrefetchScalarGridSpec(
        num_scalar_prefetch=0,
        grid=(GS,),
        in_specs=[
            pl.BlockSpec((None, GB * H, W), lambda g: (g, 0, 0)),
            pl.BlockSpec((None, GB * H, W), lambda g: (g, 0, 0)),
            pl.BlockSpec((W, Wo), lambda g: (0, 0)),                 # bh  (VMEM)
            pl.BlockSpec((GB * Ho, GB * H), lambda g: (0, 0)),       # bvd (VMEM)
            pl.BlockSpec(memory_space=pltpu.MemorySpace.SMEM),       # [C1, C2]
        ],
        out_specs=pl.BlockSpec((None, 8, 128), lambda g: (g, 0, 0)),
    )

    partial = pl.pallas_call(
        _ssim_kernel,
        out_shape=jax.ShapeDtypeStruct((GS, 8, 128), jnp.float32),
        grid_spec=grid_spec,
        compiler_params=pltpu.CompilerParams(**cp_kwargs),
    )(x1, x2, jnp.asarray(bh), jnp.asarray(bvd), c_vals)

    # Final mean of the SSIM map (size_average=True).
    return partial[:, 0, 0].sum() / jnp.float32(G * Ho * Wo)


# ----------------------------------------------------------------------------
# Pure-JAX reference (mirrors the PyTorch ssim()) for a sanity check.
# ----------------------------------------------------------------------------
def ssim_reference(img1, img2, window_size=11):
    N, C, H, W = img1.shape
    K = min(window_size, H, W)
    g = jnp.asarray(_gaussian_1d(K))
    w2d = jnp.outer(g, g)
    w = jnp.broadcast_to(w2d[None, None], (C, 1, K, K))

    def conv(x):
        return lax.conv_general_dilated(
            x, w, window_strides=(1, 1), padding="VALID",
            dimension_numbers=("NCHW", "OIHW", "NCHW"),
            feature_group_count=C,
            precision=lax.Precision.HIGHEST,
        )

    max_val = jnp.where(jnp.max(img1) > 128, 255.0, 1.0)
    min_val = jnp.where(jnp.min(img1) < -0.5, -1.0, 0.0)
    L = max_val - min_val
    C1 = (0.01 * L) ** 2
    C2 = (0.03 * L) ** 2

    i1 = img1.astype(jnp.float32)
    i2 = img2.astype(jnp.float32)
    mu1, mu2 = conv(i1), conv(i2)
    mu1_sq, mu2_sq, mu1_mu2 = mu1 ** 2, mu2 ** 2, mu1 * mu2
    sigma1_sq = conv(i1 * i1) - mu1_sq
    sigma2_sq = conv(i2 * i2) - mu2_sq
    sigma12 = conv(i1 * i2) - mu1_mu2
    v1 = 2.0 * sigma12 + C2
    v2 = sigma1_sq + sigma2_sq + C2
    ssim_map = (2 * mu1_mu2 + C1) * v1 / ((mu1_sq + mu2_sq + C1) * v2)
    return jnp.mean(ssim_map)


if __name__ == "__main__":
    key = jax.random.PRNGKey(0)
    k1, k2 = jax.random.split(key)
    N, C, H, W = 2, 4, 16, 16
    img1 = jax.random.uniform(k1, (N, C, H, W), dtype=jnp.float32)
    img2 = jax.random.uniform(k2, (N, C, H, W), dtype=jnp.float32)

    # This shape exercises GB=4, GS=2 (multi-plane stacking AND >1 grid step).
    out = jax.block_until_ready(ssim_pallas(img1, img2))
    ref = jax.block_until_ready(ssim_reference(img1, img2))

    assert np.allclose(np.asarray(out), np.asarray(ref), rtol=1e-3, atol=1e-4), (
        out, ref)

    print("KERNEL_OK")
</pallas_src>

<mosaic_0001>
module attributes {stable_mosaic.version = 11 : i64} {
  func.func @_ssim_kernel(%arg0: i32, %arg1: memref<1x64x16xf32, #tpu.memory_space<vmem>>, %arg2: memref<1x64x16xf32, #tpu.memory_space<vmem>>, %arg3: memref<16x6xf32, #tpu.memory_space<vmem>>, %arg4: memref<24x64xf32, #tpu.memory_space<vmem>>, %arg5: memref<2xf32, #tpu.memory_space<smem>>, %arg6: memref<1x8x128xf32, #tpu.memory_space<vmem>>) attributes {dimension_semantics = [#tpu.dimension_semantics<parallel>], iteration_bounds = array<i64: 2>, scalar_prefetch = 0 : i64, scratch_operands = 0 : i64, tpu.core_type = #tpu.core_type<tc>, window_params = [{transform_indices = @transform_0, window_bounds = array<i64: 1, 64, 16>}, {transform_indices = @transform_1, window_bounds = array<i64: 1, 64, 16>}, {pipeline_mode = #tpu.pipeline_mode<synchronous>, transform_indices = @transform_2, window_bounds = array<i64: 16, 6>}, {pipeline_mode = #tpu.pipeline_mode<synchronous>, transform_indices = @transform_3, window_bounds = array<i64: 24, 64>}, {transform_indices = @transform_4, window_bounds = array<i64: 2>}, {transform_indices = @transform_5, window_bounds = array<i64: 1, 8, 128>}]} {
    %c0 = arith.constant 0 : index
    %c0_0 = arith.constant 0 : index
    %c0_1 = arith.constant 0 : index
    %0 = vector.load %arg1[%c0, %c0_0, %c0_1] : memref<1x64x16xf32, #tpu.memory_space<vmem>>, vector<1x64x16xf32>
    %1 = vector.shape_cast %0 : vector<1x64x16xf32> to vector<64x16xf32>
    %c0_2 = arith.constant 0 : index
    %c0_3 = arith.constant 0 : index
    %c0_4 = arith.constant 0 : index
    %2 = vector.load %arg2[%c0_2, %c0_3, %c0_4] : memref<1x64x16xf32, #tpu.memory_space<vmem>>, vector<1x64x16xf32>
    %3 = vector.shape_cast %2 : vector<1x64x16xf32> to vector<64x16xf32>
    %c0_5 = arith.constant 0 : index
    %c0_6 = arith.constant 0 : index
    %4 = vector.load %arg3[%c0_5, %c0_6] : memref<16x6xf32, #tpu.memory_space<vmem>>, vector<16x6xf32>
    %c0_7 = arith.constant 0 : index
    %c0_8 = arith.constant 0 : index
    %5 = vector.load %arg4[%c0_7, %c0_8] : memref<24x64xf32, #tpu.memory_space<vmem>>, vector<24x64xf32>
    %6 = arith.mulf %1, %1 : vector<64x16xf32>
    %7 = arith.mulf %3, %3 : vector<64x16xf32>
    %8 = arith.mulf %1, %3 : vector<64x16xf32>
    %9 = tpu.concatenate %1, %3, %6, %7, %8 in 0 : vector<64x16xf32>, vector<64x16xf32>, vector<64x16xf32>, vector<64x16xf32>, vector<64x16xf32> -> vector<320x16xf32>
    %cst = arith.constant dense<0.000000e+00> : vector<320x6xf32>
    %10 = tpu.matmul %9, %4, %cst {dimension_numbers = #tpu.dot_dimension_numbers<[1], [0], [0], [1], [0, 0, 1, 1], [], []>} : vector<320x16xf32>, vector<16x6xf32>, vector<320x6xf32> -> vector<320x6xf32>
    %11 = vector.extract_strided_slice %10 {offsets = [0, 0], sizes = [64, 6], strides = [1, 1]} : vector<320x6xf32> to vector<64x6xf32>
    %cst_9 = arith.constant dense<0.000000e+00> : vector<24x6xf32>
    %12 = tpu.matmul %5, %11, %cst_9 {dimension_numbers = #tpu.dot_dimension_numbers<[1], [0], [0], [1], [0, 0, 1, 1], [], []>} : vector<24x64xf32>, vector<64x6xf32>, vector<24x6xf32> -> vector<24x6xf32>
    %13 = vector.extract_strided_slice %10 {offsets = [64, 0], sizes = [64, 6], strides = [1, 1]} : vector<320x6xf32> to vector<64x6xf32>
    %cst_10 = arith.constant dense<0.000000e+00> : vector<24x6xf32>
    %14 = tpu.matmul %5, %13, %cst_10 {dimension_numbers = #tpu.dot_dimension_numbers<[1], [0], [0], [1], [0, 0, 1, 1], [], []>} : vector<24x64xf32>, vector<64x6xf32>, vector<24x6xf32> -> vector<24x6xf32>
    %15 = vector.extract_strided_slice %10 {offsets = [128, 0], sizes = [64, 6], strides = [1, 1]} : vector<320x6xf32> to vector<64x6xf32>
    %cst_11 = arith.constant dense<0.000000e+00> : vector<24x6xf32>
    %16 = tpu.matmul %5, %15, %cst_11 {dimension_numbers = #tpu.dot_dimension_numbers<[1], [0], [0], [1], [0, 0, 1, 1], [], []>} : vector<24x64xf32>, vector<64x6xf32>, vector<24x6xf32> -> vector<24x6xf32>
    %17 = vector.extract_strided_slice %10 {offsets = [192, 0], sizes = [64, 6], strides = [1, 1]} : vector<320x6xf32> to vector<64x6xf32>
    %cst_12 = arith.constant dense<0.000000e+00> : vector<24x6xf32>
    %18 = tpu.matmul %5, %17, %cst_12 {dimension_numbers = #tpu.dot_dimension_numbers<[1], [0], [0], [1], [0, 0, 1, 1], [], []>} : vector<24x64xf32>, vector<64x6xf32>, vector<24x6xf32> -> vector<24x6xf32>
    %19 = vector.extract_strided_slice %10 {offsets = [256, 0], sizes = [64, 6], strides = [1, 1]} : vector<320x6xf32> to vector<64x6xf32>
    %cst_13 = arith.constant dense<0.000000e+00> : vector<24x6xf32>
    %20 = tpu.matmul %5, %19, %cst_13 {dimension_numbers = #tpu.dot_dimension_numbers<[1], [0], [0], [1], [0, 0, 1, 1], [], []>} : vector<24x64xf32>, vector<64x6xf32>, vector<24x6xf32> -> vector<24x6xf32>
    %21 = arith.mulf %12, %12 : vector<24x6xf32>
    %22 = arith.mulf %14, %14 : vector<24x6xf32>
    %23 = arith.mulf %12, %14 : vector<24x6xf32>
    %24 = arith.subf %16, %21 : vector<24x6xf32>
    %25 = arith.subf %18, %22 : vector<24x6xf32>
    %26 = arith.subf %20, %23 : vector<24x6xf32>
    %c0_14 = arith.constant 0 : index
    %27 = memref.load %arg5[%c0_14] : memref<2xf32, #tpu.memory_space<smem>>
    %c1 = arith.constant 1 : index
    %28 = memref.load %arg5[%c1] : memref<2xf32, #tpu.memory_space<smem>>
    %cst_15 = arith.constant 2.000000e+00 : f32
    %29 = vector.broadcast %cst_15 : f32 to vector<24x6xf32>
    %30 = arith.mulf %29, %26 : vector<24x6xf32>
    %31 = vector.broadcast %28 : f32 to vector<24x6xf32>
    %32 = arith.addf %30, %31 : vector<24x6xf32>
    %33 = arith.addf %24, %25 : vector<24x6xf32>
    %34 = vector.broadcast %28 : f32 to vector<24x6xf32>
    %35 = arith.addf %33, %34 : vector<24x6xf32>
    %cst_16 = arith.constant 2.000000e+00 : f32
    %36 = vector.broadcast %cst_16 : f32 to vector<24x6xf32>
    %37 = arith.mulf %36, %23 : vector<24x6xf32>
    %38 = vector.broadcast %27 : f32 to vector<24x6xf32>
    %39 = arith.addf %37, %38 : vector<24x6xf32>
    %40 = arith.mulf %39, %32 : vector<24x6xf32>
    %41 = arith.addf %21, %22 : vector<24x6xf32>
    %42 = vector.broadcast %27 : f32 to vector<24x6xf32>
    %43 = arith.addf %41, %42 : vector<24x6xf32>
    %44 = arith.mulf %43, %35 : vector<24x6xf32>
    %45 = arith.divf %40, %44 : vector<24x6xf32>
    %46 = vector.shape_cast %45 : vector<24x6xf32> to vector<1x24x6xf32>
    %cst_17 = arith.constant dense<0.000000e+00> : vector<1xf32>
    %47 = vector.multi_reduction <add>, %46, %cst_17 [1, 2] : vector<1x24x6xf32> to vector<1xf32>
    %48 = vector.shape_cast %47 : vector<1xf32> to vector<1x1x1xf32>
    %49 = vector.extract %48[0, 0, 0] : f32 from vector<1x1x1xf32>
    %50 = vector.broadcast %49 : f32 to vector<8x128xf32>
    %c0_18 = arith.constant 0 : index
    %c0_19 = arith.constant 0 : index
    %c0_20 = arith.constant 0 : index
    %51 = vector.load %arg6[%c0_18, %c0_19, %c0_20] : memref<1x8x128xf32, #tpu.memory_space<vmem>>, vector<1x8x128xf32>
    %52 = vector.shape_cast %51 : vector<1x8x128xf32> to vector<8x128xf32>
    %53 = vector.shape_cast %50 : vector<8x128xf32> to vector<1x8x128xf32>
    tpu.vector_store %arg6[%c0_18, %c0_19, %c0_20], %53 {strides = array<i32>} : memref<1x8x128xf32, #tpu.memory_space<vmem>>, vector<1x8x128xf32>,
    return
  }
  func.func @transform_0(%arg0: i32) -> (i32, i32, i32) {
    %c0_i32 = arith.constant 0 : i32
    %c0_i32_0 = arith.constant 0 : i32
    %c0_i32_1 = arith.constant 0 : i32
    return %arg0, %c0_i32, %c0_i32_0 : i32, i32, i32
  }
  func.func @transform_1(%arg0: i32) -> (i32, i32, i32) {
    %c0_i32 = arith.constant 0 : i32
    %c0_i32_0 = arith.constant 0 : i32
    %c0_i32_1 = arith.constant 0 : i32
    return %arg0, %c0_i32, %c0_i32_0 : i32, i32, i32
  }
  func.func @transform_2(%arg0: i32) -> (i32, i32) {
    %c0_i32 = arith.constant 0 : i32
    %c0_i32_0 = arith.constant 0 : i32
    %c0_i32_1 = arith.constant 0 : i32
    return %c0_i32, %c0_i32_0 : i32, i32
  }
  func.func @transform_3(%arg0: i32) -> (i32, i32) {
    %c0_i32 = arith.constant 0 : i32
    %c0_i32_0 = arith.constant 0 : i32
    %c0_i32_1 = arith.constant 0 : i32
    return %c0_i32, %c0_i32_0 : i32, i32
  }
  func.func @transform_4(%arg0: i32) -> i32 {
    %c0_i32 = arith.constant 0 : i32
    %c0_i32_0 = arith.constant 0 : i32
    return %c0_i32 : i32
  }
  func.func @transform_5(%arg0: i32) -> (i32, i32, i32) {
    %c0_i32 = arith.constant 0 : i32
    %c0_i32_0 = arith.constant 0 : i32
    %c0_i32_1 = arith.constant 0 : i32
    return %arg0, %c0_i32, %c0_i32_0 : i32, i32, i32
  }
}

</mosaic_0001>

<llo_original>
// kernel: tpu_custom_call.1
$region0: #{tpu_custom_call.1}
  #allocation0 [shape = 'u32[]', space=smem, size = 0x4, offset = 0x4, fixed_abs, tag = 'smem constant byte address 0x4 - core index']
  #allocation1 [shape = 'u32[72,128]{1,0:T(1,128)}', space=vmem, size = 0x9000, scoped, tag = 'internal scratch']
  %s0 = inlined_call_operand.vmem [shape: f32[2,64,16], index: 0, kind: input, shape index: {}]
  %s1 = inlined_call_operand.vmem [shape: f32[2,64,16], index: 1, kind: input, shape index: {}]
  %s2 = inlined_call_operand.vmem [shape: f32[16,6], index: 2, kind: input, shape index: {}]
  %s3 = inlined_call_operand.vmem [shape: f32[24,64], index: 3, kind: input, shape index: {}]
  %s4 = inlined_call_operand.vmem [shape: f32[2], index: 4, kind: input, shape index: {}]
  %s5 = inlined_call_operand.hbm [shape: f32[2,8,128], index: 5, kind: output, shape index: {}]
  %s6 = sld [smem:[#allocation0]]
  $region57: #{tpu_custom_call.1} parent=0
    _
  %s8 = ssub.s32 1, %s6
  %s9 = scalar_select 0, %s8, %s6
  $region1: #{tpu_custom_call.1} parent=0
    #allocation2 [shape = 'u8[512]{0}', space=smem, size = 0x200, scoped, tag = 'input window, operand 4, single buffered']
    #allocation3 [shape = 's32[2]{0}', space=sflag, size = 0x8, scoped, tag = 'scoped memory for tpu_custom_call.1']
    #allocation4 [shape = 's32[2]{0}', space=sflag, size = 0x8, scoped, tag = 'scoped memory for tpu_custom_call.1']
    #allocation5 [shape = 'u8[8192]{0}', space=vmem, size = 0x2000, scoped, tag = 'output window, operand 0']
    %10 = vsyncpa [#allocation4], 0
    %11 = vsyncpa [#allocation3], 0
    %s12 = scalar_lea.sflag [#allocation3], 1
    %13 = vsyncpa %s12, 0
    loop: start=0, step=1, limit=4
    $region2: #{tpu_custom_call.1} parent=1 // loop_pre_header
      _
    $region3: #{tpu_custom_call.1} parent=1 // loop_header
      %s15 = sphi 0, %s19
      %p16 = scmp.ge.s32.totalorder %s15, 4
      %s25 = sphi 0, %s27
      %s28 = sphi 0, %s25
      %s29 = sphi 0, %s28
      %s45 = sphi 0, %s29
      %s51 = sphi 0, %s53
      %s54 = sphi 0, %s51
      %s55 = sphi 0, %s54
      %s71 = sphi 0, %s55
      %s75 = sphi 0, %s75
      %s77 = sphi 0, %s75
      %s78 = sphi 0, %s77
      %s92 = sphi 0, %s78
      %s96 = sphi 0, %s96
      %s98 = sphi 0, %s96
      %s99 = sphi 0, %s98
      %s113 = sphi 0, %s99
      %s117 = sphi 0, %s117
      %s119 = sphi 0, %s117
      %s120 = sphi 0, %s119
      %s134 = sphi 0, %s120
      %s140 = sphi 0, %s142
      %s143 = sphi 0, %s140
      %s144 = sphi 0, %s143
      %s160 = sphi 0, %s144
    $region4: #{tpu_custom_call.1} parent=1 // loop_header_branch
      %18 = sbr.rel (%p16) target = $region8
    $region5: #{tpu_custom_call.1} parent=1 // loop_body
      %s20 = ssub.s32 %s15, 1
      %s21 = ssub.s32 %s15, 2
      %s22 = sadd.s32 %s15, 1
      %s23 = ssub.s32 %s15, %s22
      %p24 = scmp.eq.s32.totalorder %s23, 0
      %s26 = sadd.s32 %s25, 1
      %s27 = scalar_select %p24, %s25, %s26
      %p30 = pneg %p24
      %p31 = scmp.eq.s32.totalorder %s15, 1
      %p32 = por %p30, %p31
      %p33 = scmp.ne.s32.totalorder %s25, %s28
      %p34 = scmp.eq.s32.totalorder %s15, 0
      %p35 = por %p33, %p34
      %p36 = scmp.ne.s32.totalorder %s25, %s28
      %p37 = scmp.eq.s32.totalorder %s20, 1
      %p38 = por %p36, %p37
      %p39 = scmp.ne.s32.totalorder %s28, %s29
      %p40 = scmp.eq.s32.totalorder %s20, 0
      %p41 = por %p39, %p40
      %p42 = scmp.ne.s32.totalorder %s28, %s29
      %p43 = scmp.eq.s32.totalorder %s21, 1
      %p44 = por %p42, %p43
      %p46 = scmp.ne.s32.totalorder %s29, %s45
      %p47 = scmp.eq.s32.totalorder %s21, 0
      %p48 = por %p46, %p47
      %s49 = ssub.s32 %s15, %s22
      %p50 = scmp.eq.s32.totalorder %s49, 0
      %s52 = sadd.s32 %s51, 1
      %s53 = scalar_select %p50, %s51, %s52
      %p56 = pneg %p50
      %p57 = scmp.eq.s32.totalorder %s15, 1
      %p58 = por %p56, %p57
      %p59 = scmp.ne.s32.totalorder %s51, %s54
      %p60 = scmp.eq.s32.totalorder %s15, 0
      %p61 = por %p59, %p60
      %p62 = scmp.ne.s32.totalorder %s51, %s54
      %p63 = scmp.eq.s32.totalorder %s20, 1
      %p64 = por %p62, %p63
      %p65 = scmp.ne.s32.totalorder %s54, %s55
      %p66 = scmp.eq.s32.totalorder %s20, 0
      %p67 = por %p65, %p66
      %p68 = scmp.ne.s32.totalorder %s54, %s55
      %p69 = scmp.eq.s32.totalorder %s21, 1
      %p70 = por %p68, %p69
      %p72 = scmp.ne.s32.totalorder %s55, %s71
      %p73 = scmp.eq.s32.totalorder %s21, 0
      %p74 = por %p72, %p73
      %s76 = sadd.s32 %s75, 1
      %p79 = scmp.eq.s32.totalorder %s15, 1
      %p80 = scmp.ne.s32.totalorder %s75, %s77
      %p81 = scmp.eq.s32.totalorder %s15, 0
      %p82 = por %p80, %p81
      %p83 = scmp.ne.s32.totalorder %s75, %s77
      %p84 = scmp.eq.s32.totalorder %s20, 1
      %p85 = por %p83, %p84
      %p86 = scmp.ne.s32.totalorder %s77, %s78
      %p87 = scmp.eq.s32.totalorder %s20, 0
      %p88 = por %p86, %p87
      %p89 = scmp.ne.s32.totalorder %s77, %s78
      %p90 = scmp.eq.s32.totalorder %s21, 1
      %p91 = por %p89, %p90
      %p93 = scmp.ne.s32.totalorder %s78, %s92
      %p94 = scmp.eq.s32.totalorder %s21, 0
      %p95 = por %p93, %p94
      %s97 = sadd.s32 %s96, 1
      %p100 = scmp.eq.s32.totalorder %s15, 1
      %p101 = scmp.ne.s32.totalorder %s96, %s98
      %p102 = scmp.eq.s32.totalorder %s15, 0
      %p103 = por %p101, %p102
      %p104 = scmp.ne.s32.totalorder %s96, %s98
      %p105 = scmp.eq.s32.totalorder %s20, 1
      %p106 = por %p104, %p105
      %p107 = scmp.ne.s32.totalorder %s98, %s99
      %p108 = scmp.eq.s32.totalorder %s20, 0
      %p109 = por %p107, %p108
      %p110 = scmp.ne.s32.totalorder %s98, %s99
      %p111 = scmp.eq.s32.totalorder %s21, 1
      %p112 = por %p110, %p111
      %p114 = scmp.ne.s32.totalorder %s99, %s113
      %p115 = scmp.eq.s32.totalorder %s21, 0
      %p116 = por %p114, %p115
      %s118 = sadd.s32 %s117, 1
      %p121 = scmp.eq.s32.totalorder %s15, 1
      %p122 = scmp.ne.s32.totalorder %s117, %s119
      %p123 = scmp.eq.s32.totalorder %s15, 0
      %p124 = por %p122, %p123
      %p125 = scmp.ne.s32.totalorder %s117, %s119
      %p126 = scmp.eq.s32.totalorder %s20, 1
      %p127 = por %p125, %p126
      %p128 = scmp.ne.s32.totalorder %s119, %s120
      %p129 = scmp.eq.s32.totalorder %s20, 0
      %p130 = por %p128, %p129
      %p131 = scmp.ne.s32.totalorder %s119, %s120
      %p132 = scmp.eq.s32.totalorder %s21, 1
      %p133 = por %p131, %p132
      %p135 = scmp.ne.s32.totalorder %s120, %s134
      %p136 = scmp.eq.s32.totalorder %s21, 0
      %p137 = por %p135, %p136
      %s138 = ssub.s32 %s15, %s22
      %p139 = scmp.eq.s32.totalorder %s138, 0
      %s141 = sadd.s32 %s140, 1
      %s142 = scalar_select %p139, %s140, %s141
      %p145 = pneg %p139
      %p146 = scmp.eq.s32.totalorder %s15, 1
      %p147 = por %p145, %p146
      %p148 = scmp.ne.s32.totalorder %s140, %s143
      %p149 = scmp.eq.s32.totalorder %s15, 0
      %p150 = por %p148, %p149
      %p151 = scmp.ne.s32.totalorder %s140, %s143
      %p152 = scmp.eq.s32.totalorder %s20, 1
      %p153 = por %p151, %p152
      %p154 = scmp.ne.s32.totalorder %s143, %s144
      %p155 = scmp.eq.s32.totalorder %s20, 0
      %p156 = por %p154, %p155
      %p157 = scmp.ne.s32.totalorder %s143, %s144
      %p158 = scmp.eq.s32.totalorder %s21, 1
      %p159 = por %p157, %p158
      %p161 = scmp.ne.s32.totalorder %s144, %s160
      %p162 = scmp.eq.s32.totalorder %s21, 0
      %p163 = por %p161, %p162
      %p164 = scmp.le.s32.totalorder 1, %s15
      %p165 = scmp.lt.s32.totalorder %s15, 3
      %p166 = pnand %p164, %p165
      %p167 = pneg %p166
      // Predicated region
      $region9: #{tpu_custom_call.1} parent=5 // pred_check
        _
      $region10: #{tpu_custom_call.1} parent=5 // pred_check_branch
        %169 = sbr.rel (%p166) target = $region12
      $region11: #{tpu_custom_call.1} parent=5 // pred_region
        %s170 = ssub.s32 %s15, 1
        // Predicated region
        $region13: #{tpu_custom_call.1} parent=11 // pred_check
          %p171 = pneg %p88
        $region14: #{tpu_custom_call.1} parent=11 // pred_check_branch
          %173 = sbr.rel (%p171) target = $region16
        $region15: #{tpu_custom_call.1} parent=11 // pred_region
          _
        $region16: #{tpu_custom_call.1} parent=11 // pred_fallthru
          _
        // Predicated region
        $region17: #{tpu_custom_call.1} parent=11 // pred_check
          %p174 = pneg %p109
        $region18: #{tpu_custom_call.1} parent=11 // pred_check_branch
          %176 = sbr.rel (%p174) target = $region20
        $region19: #{tpu_custom_call.1} parent=11 // pred_region
          _
        $region20: #{tpu_custom_call.1} parent=11 // pred_fallthru
          _
        // Predicated region
        $region21: #{tpu_custom_call.1} parent=11 // pred_check
          %p177 = pneg %p130
        $region22: #{tpu_custom_call.1} parent=11 // pred_check_branch
          %179 = sbr.rel (%p177) target = $region24
        $region23: #{tpu_custom_call.1} parent=11 // pred_region
          %181 = vsyncadd [#allocation4], 0
          %s183 = sshll.u32 %s4, 4
          %s184 = int_to_ptr.vmem [resolvable:$true] %s183
          %186 = dma.vmem_to_smem %s184, 16, [#allocation2], [#allocation4]
        $region24: #{tpu_custom_call.1} parent=11 // pred_fallthru
          _
      $region12: #{tpu_custom_call.1} parent=5 // pred_fallthru
        _
      %p187 = scmp.lt.s32.totalorder %s15, 2
      // Predicated region
      $region25: #{tpu_custom_call.1} parent=5 // pred_check
        %p188 = pneg %p187
      $region26: #{tpu_custom_call.1} parent=5 // pred_check_branch
        %190 = sbr.rel (%p188) target = $region28
      $region27: #{tpu_custom_call.1} parent=5 // pred_region
        // Predicated region
        $region29: #{tpu_custom_call.1} parent=27 // pred_check
          %p191 = pneg %p35
        $region30: #{tpu_custom_call.1} parent=27 // pred_check_branch
          %193 = sbr.rel (%p191) target = $region32
        $region31: #{tpu_custom_call.1} parent=27 // pred_region
          %p194 = scmp.lt.s32.totalorder %s15, 1
          %s195 = scalar_select %p194, %s15, 1
          %s196 = smul.addr %s195, 8
          %s197 = smul.addr %s196, 8
          %s198 = scalar_lea.vmem %s0, %s197
        $region32: #{tpu_custom_call.1} parent=27 // pred_fallthru
          _
        // Predicated region
        $region33: #{tpu_custom_call.1} parent=27 // pred_check
          %p199 = pneg %p61
        $region34: #{tpu_custom_call.1} parent=27 // pred_check_branch
          %201 = sbr.rel (%p199) target = $region36
        $region35: #{tpu_custom_call.1} parent=27 // pred_region
          %p202 = scmp.lt.s32.totalorder %s15, 1
          %s203 = scalar_select %p202, %s15, 1
          %s204 = smul.addr %s203, 8
          %s205 = smul.addr %s204, 8
          %s206 = scalar_lea.vmem %s1, %s205
        $region36: #{tpu_custom_call.1} parent=27 // pred_fallthru
          _
      $region28: #{tpu_custom_call.1} parent=5 // pred_fallthru
        _
      %p207 = scmp.le.s32.totalorder 1, %s15
      %p208 = scmp.lt.s32.totalorder %s15, 3
      %p209 = pnand %p207, %p208
      %p210 = pneg %p209
      // Predicated region
      $region37: #{tpu_custom_call.1} parent=5 // pred_check
        _
      $region38: #{tpu_custom_call.1} parent=5 // pred_check_branch
        %212 = sbr.rel (%p209) target = $region40
      $region39: #{tpu_custom_call.1} parent=5 // pred_region
        %s213 = ssub.s32 %s15, 1
        // Predicated region
        $region41: #{tpu_custom_call.1} parent=39 // pred_check
          %p214 = pneg %p130
        $region42: #{tpu_custom_call.1} parent=39 // pred_check_branch
          %216 = sbr.rel (%p214) target = $region44
        $region43: #{tpu_custom_call.1} parent=39 // pred_region
          %218 = dma.done [#allocation4], 16
        $region44: #{tpu_custom_call.1} parent=39 // pred_fallthru
          _
        %219 = sfence
        %p220 = scmp.lt.s32.totalorder %s20, 1
        %s221 = scalar_select %p220, %s20, 1
        %s222 = smul.addr %s221, 8
        %s223 = smul.addr %s222, 8
        %s224 = scalar_lea.vmem %s0, %s223
        %p225 = pneg %p41
        %p226 = pneg %p38
        %p227 = scmp.lt.s32.totalorder %s20, 1
        %s228 = scalar_select %p227, %s20, 1
        %s229 = smul.addr %s228, 8
        %s230 = smul.addr %s229, 8
        %s231 = scalar_lea.vmem %s1, %s230
        %p232 = pneg %p67
        %p233 = pneg %p64
        %p234 = pneg %p88
        %p235 = pneg %p85
        %p236 = pneg %p109
        %p237 = pneg %p106
        %p238 = pneg %p130
        %p239 = pneg %p127
        %p240 = pneg %p156
        %p241 = pneg %p153
        %s242 = sand.u32 %s143, 1
        %s243 = scalar_lea.sflag [#allocation3], %s242
        %s244 = sand.u32 %s143, 1
        %s245 = smul.addr %s244, 8
        %s246 = scalar_lea.vmem [#allocation5], %s245
        %p247 = scmp.lt.s32.totalorder %s20, 1
        %s248 = scalar_select %p247, %s20, 1
        %s249 = smul.addr %s248, 8
        %s250 = smul.addr %s249, 8
        %s251 = scalar_lea.vmem %s0, %s250
        %p252 = scmp.lt.s32.totalorder %s20, 1
        %s253 = scalar_select %p252, %s20, 1
        %s254 = smul.addr %s253, 8
        %s255 = smul.addr %s254, 8
        %s256 = scalar_lea.vmem %s1, %s255
        %v257 = vld [vmem:[%s251] sm:$0xff]
        %v258 = vld [vmem:[%s251 + $0x8] sm:$0xff]
        %v259 = vld [vmem:[%s251 + $0x10] sm:$0xff]
        %v260 = vld [vmem:[%s251 + $0x18] sm:$0xff]
        %v261 = vld [vmem:[%s251 + $0x20] sm:$0xff]
        %v262 = vld [vmem:[%s251 + $0x28] sm:$0xff]
        %v263 = vld [vmem:[%s251 + $0x30] sm:$0xff]
        %v264 = vld [vmem:[%s251 + $0x38] sm:$0xff]
        %v265 = vld [vmem:[%s256] sm:$0xff]
        %v266 = vld [vmem:[%s256 + $0x8] sm:$0xff]
        %v267 = vld [vmem:[%s256 + $0x10] sm:$0xff]
        %v268 = vld [vmem:[%s256 + $0x18] sm:$0xff]
        %v269 = vld [vmem:[%s256 + $0x20] sm:$0xff]
        %v270 = vld [vmem:[%s256 + $0x28] sm:$0xff]
        %v271 = vld [vmem:[%s256 + $0x30] sm:$0xff]
        %v272 = vld [vmem:[%s256 + $0x38] sm:$0xff]
        %v273 = vld [vmem:[%s2] sm:$0xff]
        %v274 = vld [vmem:[%s2 + $0x8] sm:$0xff]
        %v275 = vld [vmem:[%s3] sm:$0xff]
        %v276 = vld [vmem:[%s3 + $0x8] sm:$0xff]
        %v277 = vld [vmem:[%s3 + $0x10] sm:$0xff]
        %v278 = vmul.f32 %v257, %v257
        %v279 = vmul.f32 %v258, %v258
        %v280 = vmul.f32 %v259, %v259
        %v281 = vmul.f32 %v260, %v260
        %v282 = vmul.f32 %v261, %v261
        %v283 = vmul.f32 %v262, %v262
        %v284 = vmul.f32 %v263, %v263
        %v285 = vmul.f32 %v264, %v264
        %v286 = vmul.f32 %v265, %v265
        %v287 = vmul.f32 %v266, %v266
        %v288 = vmul.f32 %v267, %v267
        %v289 = vmul.f32 %v268, %v268
        %v290 = vmul.f32 %v269, %v269
        %v291 = vmul.f32 %v270, %v270
        %v292 = vmul.f32 %v271, %v271
        %v293 = vmul.f32 %v272, %v272
        %v294 = vmul.f32 %v257, %v265
        %v295 = vmul.f32 %v258, %v266
        %v296 = vmul.f32 %v259, %v267
        %v297 = vmul.f32 %v260, %v268
        %v298 = vmul.f32 %v261, %v269
        %v299 = vmul.f32 %v262, %v270
        %v300 = vmul.f32 %v263, %v271
        %v301 = vmul.f32 %v264, %v272
        %vm302 = vcmask 130048
        %v304 = vsel %vm302, %v257, 0
        %v307 = vsel %vm302, %v258, 0
        %v310 = vsel %vm302, %v259, 0
        %v313 = vsel %vm302, %v260, 0
        %v316 = vsel %vm302, %v261, 0
        %v319 = vsel %vm302, %v262, 0
        %v322 = vsel %vm302, %v263, 0
        %v325 = vsel %vm302, %v264, 0
        %v328 = vsel %vm302, %v265, 0
        %v331 = vsel %vm302, %v266, 0
        %v334 = vsel %vm302, %v267, 0
        %v337 = vsel %vm302, %v268, 0
        %v340 = vsel %vm302, %v269, 0
        %v343 = vsel %vm302, %v270, 0
        %v346 = vsel %vm302, %v271, 0
        %v349 = vsel %vm302, %v272, 0
        %v352 = vsel %vm302, %v278, 0
        %v355 = vsel %vm302, %v279, 0
        %v358 = vsel %vm302, %v280, 0
        %v361 = vsel %vm302, %v281, 0
        %v364 = vsel %vm302, %v282, 0
        %v367 = vsel %vm302, %v283, 0
        %v370 = vsel %vm302, %v284, 0
        %v373 = vsel %vm302, %v285, 0
        %v376 = vsel %vm302, %v286, 0
        %v379 = vsel %vm302, %v287, 0
        %v382 = vsel %vm302, %v288, 0
        %v385 = vsel %vm302, %v289, 0
        %v388 = vsel %vm302, %v290, 0
        %v391 = vsel %vm302, %v291, 0
        %v394 = vsel %vm302, %v292, 0
        %v397 = vsel %vm302, %v293, 0
        %v400 = vsel %vm302, %v294, 0
        %v403 = vsel %vm302, %v295, 0
        %v406 = vsel %vm302, %v296, 0
        %v409 = vsel %vm302, %v297, 0
        %v412 = vsel %vm302, %v298, 0
        %v415 = vsel %vm302, %v299, 0
        %v418 = vsel %vm302, %v300, 0
        %v421 = vsel %vm302, %v301, 0
        %423 = vmatpush.msra.mxu0 0.0
        %424 = vmatpush.msra.mxu0 0.0
        %425 = vmatpush.msra.mxu0 0.0
        %426 = vmatpush.msra.mxu0 0.0
        %427 = vmatpush.msra.mxu0 0.0
        %428 = vmatpush.msra.mxu0 0.0
        %429 = vmatpush.msra.mxu0 0.0
        %430 = vmatpush.msra.mxu0 0.0
        %431 = vmatpush.msra.mxu0 0.0
        %432 = vmatpush.msra.mxu0 0.0
        %433 = vmatpush.msra.mxu0 0.0
        %434 = vmatpush.msra.mxu0 0.0
        %435 = vmatpush.msra.mxu0 0.0
        %436 = vmatpush.msra.mxu0 0.0
        %437 = vmatpush.msra.mxu0 %v274
        %438 = vmatpush.msra.mxu0 %v273
        %439 = vmatmul.f32.gmra.mxu0 %v304
        %v440 = vpop.f32.mrf.mxu0
        %v441 = vadd.f32 0.0, %v440
        %442 = vmatmul.f32.gmra.mxu0 %v307
        %v443 = vpop.f32.mrf.mxu0
        %v444 = vadd.f32 0.0, %v443
        %445 = vmatmul.f32.gmra.mxu0 %v310
        %v446 = vpop.f32.mrf.mxu0
        %v447 = vadd.f32 0.0, %v446
        %448 = vmatmul.f32.gmra.mxu0 %v313
        %v449 = vpop.f32.mrf.mxu0
        %v450 = vadd.f32 0.0, %v449
        %451 = vmatmul.f32.gmra.mxu0 %v316
        %v452 = vpop.f32.mrf.mxu0
        %v453 = vadd.f32 0.0, %v452
        %454 = vmatmul.f32.gmra.mxu0 %v319
        %v455 = vpop.f32.mrf.mxu0
        %v456 = vadd.f32 0.0, %v455
        %457 = vmatmul.f32.gmra.mxu0 %v322
        %v458 = vpop.f32.mrf.mxu0
        %v459 = vadd.f32 0.0, %v458
        %460 = vmatmul.f32.gmra.mxu0 %v325
        %v461 = vpop.f32.mrf.mxu0
        %v462 = vadd.f32 0.0, %v461
        %463 = vmatmul.f32.gmra.mxu0 %v328
        %v464 = vpop.f32.mrf.mxu0
        %v465 = vadd.f32 0.0, %v464
        %466 = vmatmul.f32.gmra.mxu0 %v331
        %v467 = vpop.f32.mrf.mxu0
        %v468 = vadd.f32 0.0, %v467
        %469 = vmatmul.f32.gmra.mxu0 %v334
        %v470 = vpop.f32.mrf.mxu0
        %v471 = vadd.f32 0.0, %v470
        %472 = vmatmul.f32.gmra.mxu0 %v337
        %v473 = vpop.f32.mrf.mxu0
        %v474 = vadd.f32 0.0, %v473
        %475 = vmatmul.f32.gmra.mxu0 %v340
        %v476 = vpop.f32.mrf.mxu0
        %v477 = vadd.f32 0.0, %v476
        %478 = vmatmul.f32.gmra.mxu0 %v343
        %v479 = vpop.f32.mrf.mxu0
        %v480 = vadd.f32 0.0, %v479
        %481 = vmatmul.f32.gmra.mxu0 %v346
        %v482 = vpop.f32.mrf.mxu0
        %v483 = vadd.f32 0.0, %v482
        %484 = vmatmul.f32.gmra.mxu0 %v349
        %v485 = vpop.f32.mrf.mxu0
        %v486 = vadd.f32 0.0, %v485
        %487 = vmatmul.f32.gmra.mxu0 %v352
        %v488 = vpop.f32.mrf.mxu0
        %v489 = vadd.f32 0.0, %v488
        %490 = vmatmul.f32.gmra.mxu0 %v355
        %v491 = vpop.f32.mrf.mxu0
        %v492 = vadd.f32 0.0, %v491
        %493 = vmatmul.f32.gmra.mxu0 %v358
        %v494 = vpop.f32.mrf.mxu0
        %v495 = vadd.f32 0.0, %v494
        %496 = vmatmul.f32.gmra.mxu0 %v361
        %v497 = vpop.f32.mrf.mxu0
        %v498 = vadd.f32 0.0, %v497
        %499 = vmatmul.f32.gmra.mxu0 %v364
        %v500 = vpop.f32.mrf.mxu0
        %v501 = vadd.f32 0.0, %v500
        %502 = vmatmul.f32.gmra.mxu0 %v367
        %v503 = vpop.f32.mrf.mxu0
        %v504 = vadd.f32 0.0, %v503
        %505 = vmatmul.f32.gmra.mxu0 %v370
        %v506 = vpop.f32.mrf.mxu0
        %v507 = vadd.f32 0.0, %v506
        %508 = vmatmul.f32.gmra.mxu0 %v373
        %v509 = vpop.f32.mrf.mxu0
        %v510 = vadd.f32 0.0, %v509
        %511 = vmatmul.f32.gmra.mxu0 %v376
        %v512 = vpop.f32.mrf.mxu0
        %v513 = vadd.f32 0.0, %v512
        %514 = vmatmul.f32.gmra.mxu0 %v379
        %v515 = vpop.f32.mrf.mxu0
        %v516 = vadd.f32 0.0, %v515
        %517 = vmatmul.f32.gmra.mxu0 %v382
        %v518 = vpop.f32.mrf.mxu0
        %v519 = vadd.f32 0.0, %v518
        %520 = vmatmul.f32.gmra.mxu0 %v385
        %v521 = vpop.f32.mrf.mxu0
        %v522 = vadd.f32 0.0, %v521
        %523 = vmatmul.f32.gmra.mxu0 %v388
        %v524 = vpop.f32.mrf.mxu0
        %v525 = vadd.f32 0.0, %v524
        %526 = vmatmul.f32.gmra.mxu0 %v391
        %v527 = vpop.f32.mrf.mxu0
        %v528 = vadd.f32 0.0, %v527
        %529 = vmatmul.f32.gmra.mxu0 %v394
        %v530 = vpop.f32.mrf.mxu0
        %v531 = vadd.f32 0.0, %v530
        %532 = vmatmul.f32.gmra.mxu0 %v397
        %v533 = vpop.f32.mrf.mxu0
        %v534 = vadd.f32 0.0, %v533
        %535 = vmatmul.f32.gmra.mxu0 %v400
        %v536 = vpop.f32.mrf.mxu0
        %v537 = vadd.f32 0.0, %v536
        %538 = vmatmul.f32.gmra.mxu0 %v403
        %v539 = vpop.f32.mrf.mxu0
        %v540 = vadd.f32 0.0, %v539
        %541 = vmatmul.f32.gmra.mxu0 %v406
        %v542 = vpop.f32.mrf.mxu0
        %v543 = vadd.f32 0.0, %v542
        %544 = vmatmul.f32.gmra.mxu0 %v409
        %v545 = vpop.f32.mrf.mxu0
        %v546 = vadd.f32 0.0, %v545
        %547 = vmatmul.f32.gmra.mxu0 %v412
        %v548 = vpop.f32.mrf.mxu0
        %v549 = vadd.f32 0.0, %v548
        %550 = vmatmul.f32.gmra.mxu0 %v415
        %v551 = vpop.f32.mrf.mxu0
        %v552 = vadd.f32 0.0, %v551
        %553 = vmatmul.f32.gmra.mxu0 %v418
        %v554 = vpop.f32.mrf.mxu0
        %v555 = vadd.f32 0.0, %v554
        %556 = vmatmul.f32.gmra.mxu0 %v421
        %v557 = vpop.f32.mrf.mxu0
        %v558 = vadd.f32 0.0, %v557
        %559 = vdwg.mxu0
        %vm560 = vcmask 523264
        %v562 = vsel %vm560, %v275, 0
        %v565 = vsel %vm560, %v276, 0
        %v568 = vsel %vm560, %v277, 0
        %570 = vmatpush.msra.mxu0 0.0
        %571 = vmatpush.msra.mxu0 0.0
        %572 = vmatpush.msra.mxu0 0.0
        %573 = vmatpush.msra.mxu0 0.0
        %574 = vmatpush.msra.mxu0 0.0
        %575 = vmatpush.msra.mxu0 0.0
        %576 = vmatpush.msra.mxu0 0.0
        %577 = vmatpush.msra.mxu0 0.0
        %578 = vmatpush.msra.mxu0 %v462
        %579 = vmatpush.msra.mxu0 %v459
        %580 = vmatpush.msra.mxu0 %v456
        %581 = vmatpush.msra.mxu0 %v453
        %582 = vmatpush.msra.mxu0 %v450
        %583 = vmatpush.msra.mxu0 %v447
        %584 = vmatpush.msra.mxu0 %v444
        %585 = vmatpush.msra.mxu0 %v441
        %586 = vmatmul.f32.gmra.mxu0 %v562
        %v587 = vpop.f32.mrf.mxu0
        %v588 = vadd.f32 0.0, %v587
        %589 = vmatmul.f32.gmra.mxu0 %v565
        %v590 = vpop.f32.mrf.mxu0
        %v591 = vadd.f32 0.0, %v590
        %592 = vmatmul.f32.gmra.mxu0 %v568
        %v593 = vpop.f32.mrf.mxu0
        %v594 = vadd.f32 0.0, %v593
        %595 = vdwg.mxu0
        %596 = vmatpush.msra.mxu0 0.0
        %597 = vmatpush.msra.mxu0 0.0
        %598 = vmatpush.msra.mxu0 0.0
        %599 = vmatpush.msra.mxu0 0.0
        %600 = vmatpush.msra.mxu0 0.0
        %601 = vmatpush.msra.mxu0 0.0
        %602 = vmatpush.msra.mxu0 0.0
        %603 = vmatpush.msra.mxu0 0.0
        %604 = vmatpush.msra.mxu0 %v486
        %605 = vmatpush.msra.mxu0 %v483
        %606 = vmatpush.msra.mxu0 %v480
        %607 = vmatpush.msra.mxu0 %v477
        %608 = vmatpush.msra.mxu0 %v474
        %609 = vmatpush.msra.mxu0 %v471
        %610 = vmatpush.msra.mxu0 %v468
        %611 = vmatpush.msra.mxu0 %v465
        %612 = vmatmul.f32.gmra.mxu0 %v562
        %v613 = vpop.f32.mrf.mxu0
        %v614 = vadd.f32 0.0, %v613
        %615 = vmatmul.f32.gmra.mxu0 %v565
        %v616 = vpop.f32.mrf.mxu0
        %v617 = vadd.f32 0.0, %v616
        %618 = vmatmul.f32.gmra.mxu0 %v568
        %v619 = vpop.f32.mrf.mxu0
        %v620 = vadd.f32 0.0, %v619
        %621 = vdwg.mxu0
        %622 = vmatpush.msra.mxu0 0.0
        %623 = vmatpush.msra.mxu0 0.0
        %624 = vmatpush.msra.mxu0 0.0
        %625 = vmatpush.msra.mxu0 0.0
        %626 = vmatpush.msra.mxu0 0.0
        %627 = vmatpush.msra.mxu0 0.0
        %628 = vmatpush.msra.mxu0 0.0
        %629 = vmatpush.msra.mxu0 0.0
        %630 = vmatpush.msra.mxu0 %v510
        %631 = vmatpush.msra.mxu0 %v507
        %632 = vmatpush.msra.mxu0 %v504
        %633 = vmatpush.msra.mxu0 %v501
        %634 = vmatpush.msra.mxu0 %v498
        %635 = vmatpush.msra.mxu0 %v495
        %636 = vmatpush.msra.mxu0 %v492
        %637 = vmatpush.msra.mxu0 %v489
        %638 = vmatmul.f32.gmra.mxu0 %v562
        %v639 = vpop.f32.mrf.mxu0
        %v640 = vadd.f32 0.0, %v639
        %641 = vmatmul.f32.gmra.mxu0 %v565
        %v642 = vpop.f32.mrf.mxu0
        %v643 = vadd.f32 0.0, %v642
        %644 = vmatmul.f32.gmra.mxu0 %v568
        %v645 = vpop.f32.mrf.mxu0
        %v646 = vadd.f32 0.0, %v645
        %647 = vdwg.mxu0
        %648 = vmatpush.msra.mxu0 0.0
        %649 = vmatpush.msra.mxu0 0.0
        %650 = vmatpush.msra.mxu0 0.0
        %651 = vmatpush.msra.mxu0 0.0
        %652 = vmatpush.msra.mxu0 0.0
        %653 = vmatpush.msra.mxu0 0.0
        %654 = vmatpush.msra.mxu0 0.0
        %655 = vmatpush.msra.mxu0 0.0
        %656 = vmatpush.msra.mxu0 %v534
        %657 = vmatpush.msra.mxu0 %v531
        %658 = vmatpush.msra.mxu0 %v528
        %659 = vmatpush.msra.mxu0 %v525
        %660 = vmatpush.msra.mxu0 %v522
        %661 = vmatpush.msra.mxu0 %v519
        %662 = vmatpush.msra.mxu0 %v516
        %663 = vmatpush.msra.mxu0 %v513
        %664 = vmatmul.f32.gmra.mxu0 %v562
        %v665 = vpop.f32.mrf.mxu0
        %v666 = vadd.f32 0.0, %v665
        %667 = vmatmul.f32.gmra.mxu0 %v565
        %v668 = vpop.f32.mrf.mxu0
        %v669 = vadd.f32 0.0, %v668
        %670 = vmatmul.f32.gmra.mxu0 %v568
        %v671 = vpop.f32.mrf.mxu0
        %v672 = vadd.f32 0.0, %v671
        %673 = vdwg.mxu0
        %674 = vmatpush.msra.mxu0 0.0
        %675 = vmatpush.msra.mxu0 0.0
        %676 = vmatpush.msra.mxu0 0.0
        %677 = vmatpush.msra.mxu0 0.0
        %678 = vmatpush.msra.mxu0 0.0
        %679 = vmatpush.msra.mxu0 0.0
        %680 = vmatpush.msra.mxu0 0.0
        %681 = vmatpush.msra.mxu0 0.0
        %682 = vmatpush.msra.mxu0 %v558
        %683 = vmatpush.msra.mxu0 %v555
        %684 = vmatpush.msra.mxu0 %v552
        %685 = vmatpush.msra.mxu0 %v549
        %686 = vmatpush.msra.mxu0 %v546
        %687 = vmatpush.msra.mxu0 %v543
        %688 = vmatpush.msra.mxu0 %v540
        %689 = vmatpush.msra.mxu0 %v537
        %690 = vmatmul.f32.gmra.mxu0 %v562
        %v691 = vpop.f32.mrf.mxu0
        %v692 = vadd.f32 0.0, %v691
        %693 = vmatmul.f32.gmra.mxu0 %v565
        %v694 = vpop.f32.mrf.mxu0
        %v695 = vadd.f32 0.0, %v694
        %696 = vmatmul.f32.gmra.mxu0 %v568
        %v697 = vpop.f32.mrf.mxu0
        %v698 = vadd.f32 0.0, %v697
        %699 = vdwg.mxu0
        %v700 = vmul.f32 %v588, %v588
        %v701 = vmul.f32 %v591, %v591
        %v702 = vmul.f32 %v594, %v594
        %v703 = vmul.f32 %v614, %v614
        %v704 = vmul.f32 %v617, %v617
        %v705 = vmul.f32 %v620, %v620
        %v706 = vmul.f32 %v588, %v614
        %v707 = vmul.f32 %v591, %v617
        %v708 = vmul.f32 %v594, %v620
        %v709 = vsub.f32 %v640, %v700
        %v710 = vsub.f32 %v643, %v701
        %v711 = vsub.f32 %v646, %v702
        %v712 = vsub.f32 %v666, %v703
        %v713 = vsub.f32 %v669, %v704
        %v714 = vsub.f32 %v672, %v705
        %v715 = vsub.f32 %v692, %v706
        %v716 = vsub.f32 %v695, %v707
        %v717 = vsub.f32 %v698, %v708
        %s718 = sld [smem:[#allocation2]]
        %s719 = sld [smem:[#allocation2 + $0x1]]
        %v720 = vmul.f32 %v715, 2.0
        %v721 = vmul.f32 %v716, 2.0
        %v722 = vmul.f32 %v717, 2.0
        %v723 = vstv %s719
        %v724 = vadd.f32 %v720, %v723
        %v725 = vadd.f32 %v721, %v723
        %v726 = vadd.f32 %v722, %v723
        %v727 = vadd.f32 %v709, %v712
        %v728 = vadd.f32 %v710, %v713
        %v729 = vadd.f32 %v711, %v714
        %v730 = vadd.f32 %v727, %v723
        %v731 = vadd.f32 %v728, %v723
        %v732 = vadd.f32 %v729, %v723
        %v733 = vmul.f32 %v706, 2.0
        %v734 = vmul.f32 %v707, 2.0
        %v735 = vmul.f32 %v708, 2.0
        %v736 = vstv %s718
        %v737 = vadd.f32 %v733, %v736
        %v738 = vadd.f32 %v734, %v736
        %v739 = vadd.f32 %v735, %v736
        %v740 = vmul.f32 %v737, %v724
        %v741 = vmul.f32 %v738, %v725
        %v742 = vmul.f32 %v739, %v726
        %v743 = vadd.f32 %v700, %v703
        %v744 = vadd.f32 %v701, %v704
        %v745 = vadd.f32 %v702, %v705
        %v746 = vadd.f32 %v743, %v736
        %v747 = vadd.f32 %v744, %v736
        %v748 = vadd.f32 %v745, %v736
        %v749 = vmul.f32 %v746, %v730
        %v750 = vmul.f32 %v747, %v731
        %v751 = vmul.f32 %v748, %v732
        %v752 = vrcp.pop %v749
        %v753 = vmul.f32 %v749, %v752
        %v754 = vsub.f32 1.0, %v753
        %v755 = vmul.f32 %v752, %v754
        %v756 = vadd.f32 %v752, %v755
        %vm757 = vweird.f32 %v749
        %vm758 = vweird.f32 %v752
        %vm759 = vmor %vm757, %vm758
        %v760 = vsel %vm759, %v752, %v756
        %v761 = vand.u32 2147483647, %v749
        %vm762 = vcmp.eq.f32.partialorder %v761, 8.507059e+37
        %v763 = vand.u32 %v749, 2147483648
        %v764 = vor.u32 1.1754944e-38, %v763
        %v765 = vsel %vm762, %v764, %v760
        %v766 = vmul.f32 %v740, %v765
        %v767 = vrcp.pop %v750
        %v768 = vmul.f32 %v750, %v767
        %v769 = vsub.f32 1.0, %v768
        %v770 = vmul.f32 %v767, %v769
        %v771 = vadd.f32 %v767, %v770
        %vm772 = vweird.f32 %v750
        %vm773 = vweird.f32 %v767
        %vm774 = vmor %vm772, %vm773
        %v775 = vsel %vm774, %v767, %v771
        %v776 = vand.u32 2147483647, %v750
        %vm777 = vcmp.eq.f32.partialorder %v776, 8.507059e+37
        %v778 = vand.u32 %v750, 2147483648
        %v779 = vor.u32 1.1754944e-38, %v778
        %v780 = vsel %vm777, %v779, %v775
        %v781 = vmul.f32 %v741, %v780
        %v782 = vrcp.pop %v751
        %v783 = vmul.f32 %v751, %v782
        %v784 = vsub.f32 1.0, %v783
        %v785 = vmul.f32 %v782, %v784
        %v786 = vadd.f32 %v782, %v785
        %vm787 = vweird.f32 %v751
        %vm788 = vweird.f32 %v782
        %vm789 = vmor %vm787, %vm788
        %v790 = vsel %vm789, %v782, %v786
        %v791 = vand.u32 2147483647, %v751
        %vm792 = vcmp.eq.f32.partialorder %v791, 8.507059e+37
        %v793 = vand.u32 %v751, 2147483648
        %v794 = vor.u32 1.1754944e-38, %v793
        %v795 = vsel %vm792, %v794, %v790
        %v796 = vmul.f32 %v742, %v795
        %vm797 = vcmask 48128
        %v798 = vsel %vm797, %v766, 0.0
        %v799 = vsel %vm797, %v781, 0.0
        %v800 = vadd.f32 %v798, %v799
        %v801 = vsel %vm797, %v796, 0.0
        %v802 = vadd.f32 %v800, %v801
        %803 = vadd.xlane.f32.xlu0 %v802
        %v804 = vpop.xlane.xlu0 %803
        %v805 = vrot.slane %v804, 4
        %v806 = vadd.f32 %v804, %v805
        %v807 = vrot.slane %v806, 2
        %v808 = vadd.f32 %v806, %v807
        %v809 = vrot.slane %v808, 1
        %v810 = vadd.f32 %v808, %v809
        %s811 = vtos %v810
        %v812 = vstv %s811
        %813 = vst [vmem:[%s246] sm:$0xff] %v812
        %s814 = sand.u32 %s143, 1
        %s815 = scalar_lea.sflag [#allocation3], %s814
        %s816 = sand.u32 %s143, 1
        %s817 = smul.addr %s816, 8
        %s818 = scalar_lea.vmem [#allocation5], %s817
        // Predicated region
        $region45: #{tpu_custom_call.1} parent=39 // pred_check
          %p819 = pneg %p153
        $region46: #{tpu_custom_call.1} parent=39 // pred_check_branch
          %821 = sbr.rel (%p819) target = $region48
        $region47: #{tpu_custom_call.1} parent=39 // pred_region
          %823 = vsyncadd %s815, 0
          %s824 = smul.addr %s20, 8
          %s825 = scalar_lea.hbm %s5, %s824
          %s827 = sshll.u32 %s818, 4
          %s828 = int_to_ptr.vmem [resolvable:$true] %s827
          %s829 = sshll.u32 %s825, 4
          %s830 = int_to_ptr.hbm [resolvable:$true] %s829
          %832 = dma.vmem_to_hbm [thread:$0]  %s828, 128, %s830, %s815
        $region48: #{tpu_custom_call.1} parent=39 // pred_fallthru
          _
      $region40: #{tpu_custom_call.1} parent=5 // pred_fallthru
        _
      %p833 = scmp.le.s32.totalorder 2, %s15
      // Predicated region
      $region49: #{tpu_custom_call.1} parent=5 // pred_check
        %p834 = pneg %p833
      $region50: #{tpu_custom_call.1} parent=5 // pred_check_branch
        %836 = sbr.rel (%p834) target = $region52
      $region51: #{tpu_custom_call.1} parent=5 // pred_region
        %s837 = ssub.s32 %s15, 2
        // Predicated region
        $region53: #{tpu_custom_call.1} parent=51 // pred_check
          %p838 = pneg %p159
        $region54: #{tpu_custom_call.1} parent=51 // pred_check_branch
          %840 = sbr.rel (%p838) target = $region56
        $region55: #{tpu_custom_call.1} parent=51 // pred_region
          %s841 = sand.u32 %s144, 1
          %s842 = scalar_lea.sflag [#allocation3], %s841
          %s843 = sand.u32 %s144, 1
          %s844 = smul.addr %s843, 8
          %s845 = scalar_lea.vmem [#allocation5], %s844
          %847 = dma.done %s842, 128
        $region56: #{tpu_custom_call.1} parent=51 // pred_fallthru
          _
      $region52: #{tpu_custom_call.1} parent=5 // pred_fallthru
        _
    $region6: #{tpu_custom_call.1} parent=1 // loop_footer
      %s19 = sadd.s32 1, %s15
    $region7: #{tpu_custom_call.1} parent=1 // loop_footer_branch
      %14 = sbr.rel target = $region3
    $region8: #{tpu_custom_call.1} parent=1 // loop_exit
      _
    %848 = vsyncpa [#allocation3], 1
    %s849 = scalar_lea.sflag [#allocation3], 1
    %850 = vsyncpa %s849, 1
    %851 = vsyncpa [#allocation4], 1
    %s852 = scalar_lea.sflag [#allocation4], 1
    %853 = vsyncpa %s852, 1

</llo_original>
